<compile_context>
chip_gen: v6e
topology: v6e:2x2x1
jax: 0.10.0
libtpu: 0.0.40
codegen_flags: <defaults>
</compile_context>

<pallas_src>
import functools

import jax
import jax.numpy as jnp
from jax.experimental import pallas as pl
from jax.experimental.pallas import tpu as pltpu


def _vmem_capacity_bytes():
    """Physical VMEM per core; conservative (v7x-sized) fallback off-TPU."""
    try:
        cap = int(getattr(pltpu.get_tpu_info(), "vmem_capacity_bytes"))
        if cap > 0:
            return cap
    except Exception:
        pass
    return 64 * 1024 * 1024


def _choose_row_tile(M, L, itemsize, vmem_budget):
    """Rows per tile: fill the VMEM budget, but keep >= ~4 pipelined steps."""
    mult = max(8, 32 // itemsize)            # sublane packing (8/16/32 rows)
    if M <= mult:
        return M                             # tiny input: one full block (legal)
    lane_padded = pl.cdiv(L, 128) * 128      # VMEM rounds the lane dim to 128
    # double-buffered input tile + lane-padded (row_tile, cols) output block
    per_row_bytes = 2 * (lane_padded + 128) * itemsize
    t = max(mult, (vmem_budget // per_row_bytes) // mult * mult)
    # Cap so the grid has >= 4 steps (2 per v7x TensorCore) when M allows it,
    # else >= 2 steps, so Pallas' prefetch/writeback pipeline stays active.
    for blocks in (4, 2):
        cap = (M // blocks) // mult * mult
        if cap >= mult:
            t = min(t, cap)
            break
    # Never exceed the sublane-rounded row count (keeps block dim divisible
    # by 8 while leaving only the last block partial).
    t = min(t, (M // mult) * mult)
    return max(mult, t)


def _global_pool_kernel(x_ref, ones_ref, out_ref, *, inv_area, pool_type):
    # x_ref: (row_tile, L) tile in VMEM; reduce over the lane (last) axis.
    x = x_ref[...]
    if pool_type != "avg":
        # Max stays on the VPU/XLU path; widened to f32 for the fused blend.
        m = jnp.max(x, axis=-1, keepdims=True).astype(jnp.float32)   # (T, 1)
    if pool_type != "max":
        # Row sum on the MXU (frees the XLU, native f32 accumulation).
        s = jnp.dot(x, ones_ref[...], preferred_element_type=jnp.float32)
        avg = s * inv_area                                            # (T, 1)

    if pool_type == "avg":
        out_ref[...] = avg.astype(out_ref.dtype)
    elif pool_type == "max":
        out_ref[...] = m.astype(out_ref.dtype)
    elif pool_type == "avgmax":
        # Blend in f32 before the single cast/store.
        out_ref[...] = (0.5 * (avg + m)).astype(out_ref.dtype)
    else:  # 'avgmaxc': both columns, assembled once -> single store per tile.
        out_ref[...] = jnp.concatenate([avg, m], axis=-1).astype(out_ref.dtype)


def adaptive_avg_max_pool2d(x, pool_type="avg", row_tile=None):
    """Pallas equivalent of AdaptiveAvgMaxPool2d(output_size=1, pool_type).

    x: (N, C, H, W). Returns (N, C, 1, 1), except 'avgmaxc' which returns
    (N, 2*C, 1, 1), matching the PyTorch module.
    """
    if pool_type not in ("avg", "max", "avgmax", "avgmaxc"):
        pool_type = "avg"                    # PyTorch falls back to avg pooling

    N, C, H, W = x.shape
    M = N * C
    L = H * W
    x2 = x.reshape(M, L)
    itemsize = x.dtype.itemsize
    out_cols = 2 if pool_type == "avgmaxc" else 1

    cap = _vmem_capacity_bytes()
    # Working-set budget (2x input tile + 2x padded out block) and the scoped
    # VMEM limit, both derived from the chip's actual capacity.
    vmem_budget = min(int(cap * 0.6), 48 * 1024 * 1024)
    vmem_limit = min(int(cap * 3 // 4), 64 * 1024 * 1024)

    if row_tile is None:
        row_tile = _choose_row_tile(M, L, itemsize, vmem_budget)

    grid_m = pl.cdiv(M, row_tile)
    rows_out = grid_m * row_tile             # output padded to whole blocks

    ones = jnp.ones((L, 1), x.dtype)         # MXU reduction operand (tiny)

    kernel = functools.partial(
        _global_pool_kernel, inv_area=float(1.0 / L), pool_type=pool_type)

    cost = pl.CostEstimate(
        flops=2 * M * L,
        transcendentals=0,
        bytes_accessed=M * L * itemsize + rows_out * out_cols * itemsize
        + L * itemsize,
    )

    out = pl.pallas_call(
        kernel,
        out_shape=jax.ShapeDtypeStruct((rows_out, out_cols), x.dtype),
        grid_spec=pltpu.PrefetchScalarGridSpec(
            num_scalar_prefetch=0,
            grid=(grid_m,),
            in_specs=[
                pl.BlockSpec((row_tile, L), lambda i: (i, 0)),
                pl.BlockSpec((L, 1), lambda i: (0, 0)),   # resident ones vector
            ],
            out_specs=pl.BlockSpec((row_tile, out_cols), lambda i: (i, 0)),
        ),
        compiler_params=pltpu.CompilerParams(
            dimension_semantics=("parallel",),            # megacore-shardable
            vmem_limit_bytes=vmem_limit,
        ),
        cost_estimate=cost,
    )(x2, ones)

    if pool_type == "avgmaxc":
        avg = out[:M, 0].reshape(N, C, 1, 1)
        mx = out[:M, 1].reshape(N, C, 1, 1)
        return jnp.concatenate([avg, mx], axis=1)
    return out[:M, 0].reshape(N, C, 1, 1)


def _reference(x, pool_type):
    ref_avg = jnp.mean(x, axis=(2, 3), keepdims=True)
    ref_max = jnp.max(x, axis=(2, 3), keepdims=True)
    if pool_type == "avgmaxc":
        return jnp.concatenate([ref_avg, ref_max], axis=1)
    if pool_type == "avgmax":
        return 0.5 * (ref_avg + ref_max)
    if pool_type == "max":
        return ref_max
    return ref_avg


if __name__ == "__main__":
    key = jax.random.PRNGKey(0)
    pool_types = ("avg", "max", "avgmax", "avgmaxc")

    # 1) Primary small case (matches the module's typical usage).
    x = jax.random.normal(key, (2, 4, 16, 16), dtype=jnp.float32)
    for pt in pool_types:
        out = jax.block_until_ready(adaptive_avg_max_pool2d(x, pool_type=pt))
        ref = _reference(x, pt)
        assert out.shape == ref.shape, (pt, out.shape, ref.shape)
        assert jnp.allclose(out, ref, atol=1e-5, rtol=1e-5), pt

    # 2) Ragged rows (N*C not a multiple of 8) and non-128 spatial size
    #    (auto row_tile gives a 2-step grid with a partial last block).
    x2 = jax.random.normal(jax.random.PRNGKey(1), (2, 5, 7, 7), dtype=jnp.float32)
    for pt in ("avg", "max", "avgmaxc"):
        out = jax.block_until_ready(adaptive_avg_max_pool2d(x2, pool_type=pt))
        ref = _reference(x2, pt)
        assert out.shape == ref.shape, (pt, out.shape, ref.shape)
        assert jnp.allclose(out, ref, atol=1e-5, rtol=1e-5), pt

    # 3) Force a multi-block grid with a partial last row block (no pad path).
    x3 = jax.random.normal(jax.random.PRNGKey(2), (2, 36, 4, 4), dtype=jnp.float32)
    out = jax.block_until_ready(
        adaptive_avg_max_pool2d(x3, pool_type="avgmax", row_tile=16))
    ref = _reference(x3, "avgmax")
    assert out.shape == ref.shape
    assert jnp.allclose(out, ref, atol=1e-5, rtol=1e-5)

    # 4) Auto-tiling path on a larger M (exercises the >=4-block cap).
    x4 = jax.random.normal(jax.random.PRNGKey(3), (4, 32, 8, 8), dtype=jnp.float32)
    out = jax.block_until_ready(adaptive_avg_max_pool2d(x4, pool_type="avgmaxc"))
    ref = _reference(x4, "avgmaxc")
    assert out.shape == ref.shape
    assert jnp.allclose(out, ref, atol=1e-5, rtol=1e-5)

    print("KERNEL_OK")
</pallas_src>

<mosaic_0001>
module attributes {stable_mosaic.version = 11 : i64} {
  func.func @_global_pool_kernel(%arg0: i32, %arg1: memref<8x256xf32, #tpu.memory_space<vmem>>, %arg2: memref<256x1xf32, #tpu.memory_space<vmem>>, %arg3: memref<8x1xf32, #tpu.memory_space<vmem>>) attributes {dimension_semantics = [#tpu.dimension_semantics<parallel>], iteration_bounds = array<i64: 1>, scalar_prefetch = 0 : i64, scratch_operands = 0 : i64, tpu.core_type = #tpu.core_type<tc>, window_params = [{transform_indices = @transform_0, window_bounds = array<i64: 8, 256>}, {pipeline_mode = #tpu.pipeline_mode<synchronous>, transform_indices = @transform_1, window_bounds = array<i64: 256, 1>}, {transform_indices = @transform_2, window_bounds = array<i64: 8, 1>}]} {
    %c0 = arith.constant 0 : index
    %c0_0 = arith.constant 0 : index
    %0 = vector.load %arg1[%c0, %c0_0] : memref<8x256xf32, #tpu.memory_space<vmem>>, vector<8x256xf32>
    %c0_1 = arith.constant 0 : index
    %c0_2 = arith.constant 0 : index
    %1 = vector.load %arg2[%c0_1, %c0_2] : memref<256x1xf32, #tpu.memory_space<vmem>>, vector<256x1xf32>
    %cst = arith.constant dense<0.000000e+00> : vector<8x1xf32>
    %2 = tpu.matmul %0, %1, %cst {dimension_numbers = #tpu.dot_dimension_numbers<[1], [0], [0], [1], [0, 0, 1, 1], [], []>} : vector<8x256xf32>, vector<256x1xf32>, vector<8x1xf32> -> vector<8x1xf32>
    %cst_3 = arith.constant 3.906250e-03 : f32
    %3 = vector.broadcast %cst_3 : f32 to vector<8x1xf32>
    %4 = arith.mulf %2, %3 : vector<8x1xf32>
    %c0_4 = arith.constant 0 : index
    %c0_5 = arith.constant 0 : index
    %5 = vector.load %arg3[%c0_4, %c0_5] : memref<8x1xf32, #tpu.memory_space<vmem>>, vector<8x1xf32>
    tpu.vector_store %arg3[%c0_4, %c0_5], %4 {strides = array<i32>} : memref<8x1xf32, #tpu.memory_space<vmem>>, vector<8x1xf32>,
    return
  }
  func.func @transform_0(%arg0: i32) -> (i32, i32) {
    %c0_i32 = arith.constant 0 : i32
    %c0_i32_0 = arith.constant 0 : i32
    return %arg0, %c0_i32 : i32, i32
  }
  func.func @transform_1(%arg0: i32) -> (i32, i32) {
    %c0_i32 = arith.constant 0 : i32
    %c0_i32_0 = arith.constant 0 : i32
    %c0_i32_1 = arith.constant 0 : i32
    return %c0_i32, %c0_i32_0 : i32, i32
  }
  func.func @transform_2(%arg0: i32) -> (i32, i32) {
    %c0_i32 = arith.constant 0 : i32
    %c0_i32_0 = arith.constant 0 : i32
    return %arg0, %c0_i32 : i32, i32
  }
}

</mosaic_0001>

<llo_original>
// kernel: tpu_custom_call.1
$region0: #{tpu_custom_call.1}
  #allocation0 [shape = 'u32[]', space=smem, size = 0x4, offset = 0x4, fixed_abs, tag = 'smem constant byte address 0x4 - core index']
  #allocation1 [shape = 'u32[144,128]{1,0:T(1,128)}', space=vmem, size = 0x12000, scoped, tag = 'internal scratch']
  %s0 = inlined_call_operand.vmem [shape: f32[8,256], index: 0, kind: input, shape index: {}]
  %s1 = inlined_call_operand.vmem [shape: f32[256,1], index: 1, kind: input, shape index: {}]
  %s2 = inlined_call_operand.vmem [shape: f32[8,1], index: 2, kind: output, shape index: {}]
  %s3 = sld [smem:[#allocation0]]
  $region18: #{tpu_custom_call.1} parent=0
    _
  %s5 = ssub.s32 1, %s3
  %s6 = scalar_select 0, %s5, %s3
  // Predicated region
  $region2: #{tpu_custom_call.1} parent=0 // pred_check
    _
  $region3: #{tpu_custom_call.1} parent=0 // pred_check_branch
    %8 = sbr.rel (0) target = $region5
  $region4: #{tpu_custom_call.1} parent=0 // pred_region
    _
  $region5: #{tpu_custom_call.1} parent=0 // pred_fallthru
    _
  // Predicated region
  $region6: #{tpu_custom_call.1} parent=0 // pred_check
    _
  $region7: #{tpu_custom_call.1} parent=0 // pred_check_branch
    %10 = sbr.rel (0) target = $region9
  $region8: #{tpu_custom_call.1} parent=0 // pred_region
    _
  $region9: #{tpu_custom_call.1} parent=0 // pred_fallthru
    _
  %v11 = vld [vmem:[%s0] sm:$0xff]
  %v12 = vld [vmem:[%s0 + $0x8] sm:$0xff]
  %v13 = vld [vmem:[%s1] sm:$0xff]
  %v14 = vld [vmem:[%s1 + $0x8] sm:$0xff]
  %v15 = vld [vmem:[%s1 + $0x10] sm:$0xff]
  %v16 = vld [vmem:[%s1 + $0x18] sm:$0xff]
  %v17 = vld [vmem:[%s1 + $0x20] sm:$0xff]
  %v18 = vld [vmem:[%s1 + $0x28] sm:$0xff]
  %v19 = vld [vmem:[%s1 + $0x30] sm:$0xff]
  %v20 = vld [vmem:[%s1 + $0x38] sm:$0xff]
  %v21 = vld [vmem:[%s1 + $0x40] sm:$0xff]
  %v22 = vld [vmem:[%s1 + $0x48] sm:$0xff]
  %v23 = vld [vmem:[%s1 + $0x50] sm:$0xff]
  %v24 = vld [vmem:[%s1 + $0x58] sm:$0xff]
  %v25 = vld [vmem:[%s1 + $0x60] sm:$0xff]
  %v26 = vld [vmem:[%s1 + $0x68] sm:$0xff]
  %v27 = vld [vmem:[%s1 + $0x70] sm:$0xff]
  %v28 = vld [vmem:[%s1 + $0x78] sm:$0xff]
  %v29 = vld [vmem:[%s1 + $0x80] sm:$0xff]
  %v30 = vld [vmem:[%s1 + $0x88] sm:$0xff]
  %v31 = vld [vmem:[%s1 + $0x90] sm:$0xff]
  %v32 = vld [vmem:[%s1 + $0x98] sm:$0xff]
  %v33 = vld [vmem:[%s1 + $0xa0] sm:$0xff]
  %v34 = vld [vmem:[%s1 + $0xa8] sm:$0xff]
  %v35 = vld [vmem:[%s1 + $0xb0] sm:$0xff]
  %v36 = vld [vmem:[%s1 + $0xb8] sm:$0xff]
  %v37 = vld [vmem:[%s1 + $0xc0] sm:$0xff]
  %v38 = vld [vmem:[%s1 + $0xc8] sm:$0xff]
  %v39 = vld [vmem:[%s1 + $0xd0] sm:$0xff]
  %v40 = vld [vmem:[%s1 + $0xd8] sm:$0xff]
  %v41 = vld [vmem:[%s1 + $0xe0] sm:$0xff]
  %v42 = vld [vmem:[%s1 + $0xe8] sm:$0xff]
  %v43 = vld [vmem:[%s1 + $0xf0] sm:$0xff]
  %v44 = vld [vmem:[%s1 + $0xf8] sm:$0xff]
  %45 = vmatprep.subr.mxu0 0.0
  %46 = vmatpush1.msra.mxu0 %v28
  %47 = vmatprep.subr.mxu0 0.0
  %48 = vmatpush1.msra.mxu0 %v27
  %49 = vmatprep.subr.mxu0 0.0
  %50 = vmatpush1.msra.mxu0 %v26
  %51 = vmatprep.subr.mxu0 0.0
  %52 = vmatpush1.msra.mxu0 %v25
  %53 = vmatprep.subr.mxu0 0.0
  %54 = vmatpush1.msra.mxu0 %v24
  %55 = vmatprep.subr.mxu0 0.0
  %56 = vmatpush1.msra.mxu0 %v23
  %57 = vmatprep.subr.mxu0 0.0
  %58 = vmatpush1.msra.mxu0 %v22
  %59 = vmatprep.subr.mxu0 0.0
  %60 = vmatpush1.msra.mxu0 %v21
  %61 = vmatprep.subr.mxu0 0.0
  %62 = vmatpush1.msra.mxu0 %v20
  %63 = vmatprep.subr.mxu0 0.0
  %64 = vmatpush1.msra.mxu0 %v19
  %65 = vmatprep.subr.mxu0 0.0
  %66 = vmatpush1.msra.mxu0 %v18
  %67 = vmatprep.subr.mxu0 0.0
  %68 = vmatpush1.msra.mxu0 %v17
  %69 = vmatprep.subr.mxu0 0.0
  %70 = vmatpush1.msra.mxu0 %v16
  %71 = vmatprep.subr.mxu0 0.0
  %72 = vmatpush1.msra.mxu0 %v15
  %73 = vmatprep.subr.mxu0 0.0
  %74 = vmatpush1.msra.mxu0 %v14
  %75 = vmatprep.subr.mxu0 0.0
  %76 = vmatpush1.msra.mxu0 %v13
  %77 = vmatprep.subr.mxu0 0.0
  %78 = vmatpush2.msra.mxu0 %v44
  %79 = vmatprep.subr.mxu0 0.0
  %80 = vmatpush2.msra.mxu0 %v43
  %81 = vmatprep.subr.mxu0 0.0
  %82 = vmatpush2.msra.mxu0 %v42
  %83 = vmatprep.subr.mxu0 0.0
  %84 = vmatpush2.msra.mxu0 %v41
  %85 = vmatprep.subr.mxu0 0.0
  %86 = vmatpush2.msra.mxu0 %v40
  %87 = vmatprep.subr.mxu0 0.0
  %88 = vmatpush2.msra.mxu0 %v39
  %89 = vmatprep.subr.mxu0 0.0
  %90 = vmatpush2.msra.mxu0 %v38
  %91 = vmatprep.subr.mxu0 0.0
  %92 = vmatpush2.msra.mxu0 %v37
  %93 = vmatprep.subr.mxu0 0.0
  %94 = vmatpush2.msra.mxu0 %v36
  %95 = vmatprep.subr.mxu0 0.0
  %96 = vmatpush2.msra.mxu0 %v35
  %97 = vmatprep.subr.mxu0 0.0
  %98 = vmatpush2.msra.mxu0 %v34
  %99 = vmatprep.subr.mxu0 0.0
  %100 = vmatpush2.msra.mxu0 %v33
  %101 = vmatprep.subr.mxu0 0.0
  %102 = vmatpush2.msra.mxu0 %v32
  %103 = vmatprep.subr.mxu0 0.0
  %104 = vmatpush2.msra.mxu0 %v31
  %105 = vmatprep.subr.mxu0 0.0
  %106 = vmatpush2.msra.mxu0 %v30
  %107 = vmatprep.subr.mxu0 0.0
  %108 = vmatpush2.msra.mxu0 %v29
  %109 = vmatprep.mubr.f32.mxu0 %v12
  %110 = vmatmul.mubr.f32.gmra.mxu0 %v11
  %v111 = vpop.f32.mrf.mxu0
  %v112 = vadd.f32 0.0, %v111
  %v113 = vpop.f32.mrf.mxu0
  %114 = vdwg.mxu0
  %v115 = vmul.f32 %v112, 0.00390625
  %vm116 = vcmask 7168
  %117 = vst.msk [vmem:[%s2] sm:$0xff] %vm116, %v115
  // Predicated region
  $region10: #{tpu_custom_call.1} parent=0 // pred_check
    _
  $region11: #{tpu_custom_call.1} parent=0 // pred_check_branch
    %119 = sbr.rel (0) target = $region13
  $region12: #{tpu_custom_call.1} parent=0 // pred_region
    _
  $region13: #{tpu_custom_call.1} parent=0 // pred_fallthru
    _
  // Predicated region
  $region14: #{tpu_custom_call.1} parent=0 // pred_check
    _
  $region15: #{tpu_custom_call.1} parent=0 // pred_check_branch
    %121 = sbr.rel (0) target = $region17
  $region16: #{tpu_custom_call.1} parent=0 // pred_region
    _
  $region17: #{tpu_custom_call.1} parent=0 // pred_fallthru
    _

</llo_original>
